<compile_context>
chip_gen: v5e
topology: v5e:2x2
jax: 0.10.0
libtpu: 0.0.40
codegen_flags: <defaults>
</compile_context>

<pallas_src>
import jax
import jax.numpy as jnp
from jax.experimental import pallas as pl
from jax.experimental.pallas import tpu as pltpu

_MIB = 1024 * 1024


def _cdiv(a, b):
    return -(-a // b)


def _round_up(a, b):
    return _cdiv(a, b) * b


# ----------------------------------------------------------------------------
# Generation-aware VMEM budgeting.
# ----------------------------------------------------------------------------
def _tpu_info():
    """Returns (is_v7x, is_v5e, physical_vmem_bytes); robust to missing introspection."""
    kind = ""
    try:
        kind = (getattr(jax.devices()[0], "device_kind", "") or "").lower()
    except Exception:
        pass
    is_v7 = ("v7" in kind) or ("tpu7" in kind)
    is_v5e = ("v5e" in kind) or ("v5 lite" in kind) or ("v5lite" in kind)
    vmem_cap = None
    try:
        cap = getattr(pltpu.get_tpu_info(), "vmem_capacity_bytes", None)
        if cap:
            vmem_cap = int(cap)
    except Exception:
        vmem_cap = None
    if vmem_cap is None:
        vmem_cap = 64 * _MIB if is_v7 else 128 * _MIB
    return is_v7, is_v5e, vmem_cap


def _budgets(vmem_cap):
    """Tile-footprint budget and scoped-VMEM limit derived from physical VMEM.

    128 MiB chips (v5e/v6e) -> ~96 MiB tile budget / 104 MiB scoped limit;
    64 MiB chips (v7x)      -> ~40 MiB tile budget /  48 MiB scoped limit."""
    budget = max(16 * _MIB, min(int(0.75 * vmem_cap), vmem_cap - 24 * _MIB))
    vmem_limit = max(32 * _MIB, min(vmem_cap - 8 * _MIB, budget + 8 * _MIB))
    return int(budget), int(vmem_limit)


def _choose_batch_tile(B, C, N, itemsize, budget, is_v7, in_bufs):
    """Largest TB whose pipelined tiles + live f32 temporaries fit the budget.

    Accounts for: 2 inputs x `in_bufs` buffers + double-buffered output
    + ~3 live full-tile f32 temporaries (f_sum, cast copies, pre-store product).
    Returns None if even a single batch row does not fit (use the N-tiled path)."""
    bytes_per_elem = 2 * in_bufs * itemsize + 2 * itemsize + 3 * 4
    per_batch = bytes_per_elem * C * N
    if per_batch > budget:
        return None
    tb = int(min(B, max(1, budget // per_batch)))
    if is_v7 and B > 1:
        # Only v7x has 2 TensorCores: aim for an even, balanced grid along the
        # parallel batch axis.  On single-TC v5e/v6e extra steps are pure
        # per-step overhead, so no splitting there.
        steps = max(2, _cdiv(B, tb))
        if steps % 2:
            steps += 1
        tb = _cdiv(B, steps)
    return tb


def _choose_n_tile(C, N, itemsize, budget, tn):
    if tn is not None:
        return int(min(_round_up(tn, 128), _round_up(N, 128)))
    bytes_per_lane = (2 * 2 * itemsize + 2 * itemsize + 3 * 4) * C  # TB = 1
    max_tn = max(128, (budget // bytes_per_lane) // 128 * 128)
    return int(min(max_tn, _round_up(N, 128)))


def _x_spec(shape, index_map, n_buffers):
    """BlockSpec for the big streamed arrays; optionally 3-deep buffered (v5e)."""
    if n_buffers != 2:
        try:
            return pl.BlockSpec(shape, index_map, pipeline_mode=pl.Buffered(n_buffers))
        except TypeError:  # pipeline_mode not supported -> default double-buffering
            pass
    return pl.BlockSpec(shape, index_map)


# ----------------------------------------------------------------------------
# Kernels.
# ----------------------------------------------------------------------------
def _fused_kernel(bias_ref,                    # SMEM (2,): [b_sc, b_sn]
                  xc_ref, xn_ref,              # (TB, C, N) VMEM tiles
                  wsc_ref, wsn_ref,            # (C, 1) spatial-att weights
                  w1t_ref, w2t_ref,            # (C, Cr), (Cr, C) SE weights (pre-transposed)
                  out_ref):                    # (TB, C, N)
    # Hoist SMEM scalar reads before any vector work / implicit waits.
    b_sc = bias_ref[0]
    b_sn = bias_ref[1]

    xc = xc_ref[...].astype(jnp.float32)             # (TB, C, N)
    xn = xn_ref[...].astype(jnp.float32)

    # Spatial attention (1x1 conv C -> 1 + bias + sigmoid): VPU mul + XLU reduce.
    w_c = wsc_ref[...][None, :, :]                   # (1, C, 1)
    w_n = wsn_ref[...][None, :, :]
    att_c = jax.nn.sigmoid(jnp.sum(xc * w_c, axis=1, keepdims=True) + b_sc)  # (TB,1,N)
    att_n = jax.nn.sigmoid(jnp.sum(xn * w_n, axis=1, keepdims=True) + b_sn)

    # Algebraically fused: (xc + xc*att_n) + (xn + xn*att_c) == xc*(1+att_n) + xn*(1+att_c)
    f_sum = xc * (1.0 + att_n) + xn * (1.0 + att_c)  # (TB, C, N)

    # Channel attention (SE): avgpool over N, two tiny lane-dense matmuls.
    y = jnp.mean(f_sum, axis=2)                      # (TB, C)
    h = jnp.maximum(jnp.dot(y, w1t_ref[...], preferred_element_type=jnp.float32), 0.0)
    att_ch = jax.nn.sigmoid(jnp.dot(h, w2t_ref[...], preferred_element_type=jnp.float32))

    out_ref[...] = (f_sum * att_ch[:, :, None]).astype(out_ref.dtype)


def _make_reduce_kernel(n_valid, n_tile, needs_mask):
    """Pass 1 of the N-tiled path: accumulate mean over N, emit SE attention."""
    inv_n = 1.0 / float(n_valid)

    def kernel(bias_ref, xc_ref, xn_ref, wsc_ref, wsn_ref, w1t_ref, w2t_ref,
               attch_ref, acc_ref):
        ni = pl.program_id(1)
        b_sc = bias_ref[0]
        b_sn = bias_ref[1]

        @pl.when(ni == 0)
        def _():
            acc_ref[...] = jnp.zeros_like(acc_ref)

        xc = xc_ref[...].astype(jnp.float32)         # (1, C, TN)
        xn = xn_ref[...].astype(jnp.float32)
        w_c = wsc_ref[...][None, :, :]
        w_n = wsn_ref[...][None, :, :]
        att_c = jax.nn.sigmoid(jnp.sum(xc * w_c, axis=1, keepdims=True) + b_sc)
        att_n = jax.nn.sigmoid(jnp.sum(xn * w_n, axis=1, keepdims=True) + b_sn)
        f_sum = xc * (1.0 + att_n) + xn * (1.0 + att_c)

        if needs_mask:
            lane = jax.lax.broadcasted_iota(jnp.int32, f_sum.shape, 2) + ni * n_tile
            f_sum = jnp.where(lane < n_valid, f_sum, 0.0)

        acc_ref[...] += jnp.sum(f_sum, axis=2)       # (1, C)

        @pl.when(ni == pl.num_programs(1) - 1)
        def _():
            y = acc_ref[...] * inv_n                 # (1, C)
            h = jnp.maximum(jnp.dot(y, w1t_ref[...], preferred_element_type=jnp.float32), 0.0)
            att_ch = jax.nn.sigmoid(jnp.dot(h, w2t_ref[...], preferred_element_type=jnp.float32))
            attch_ref[...] = att_ch[:, None, :].astype(attch_ref.dtype)   # (1, 1, C)

    return kernel


def _apply_kernel(bias_ref, xc_ref, xn_ref, wsc_ref, wsn_ref, attch_ref, out_ref):
    """Pass 2 of the N-tiled path: recompute the cheap fusion, apply channel att."""
    b_sc = bias_ref[0]
    b_sn = bias_ref[1]
    xc = xc_ref[...].astype(jnp.float32)             # (1, C, TN)
    xn = xn_ref[...].astype(jnp.float32)
    w_c = wsc_ref[...][None, :, :]
    w_n = wsn_ref[...][None, :, :]
    att_c = jax.nn.sigmoid(jnp.sum(xc * w_c, axis=1, keepdims=True) + b_sc)
    att_n = jax.nn.sigmoid(jnp.sum(xn * w_n, axis=1, keepdims=True) + b_sn)
    f_sum = xc * (1.0 + att_n) + xn * (1.0 + att_c)
    att_ch = jnp.transpose(attch_ref[...].astype(jnp.float32), (0, 2, 1))  # (1, C, 1)
    out_ref[...] = (f_sum * att_ch).astype(out_ref.dtype)


# ----------------------------------------------------------------------------
# Wrapper.
# ----------------------------------------------------------------------------
def cross_fusion_attention(x_c, x_n, params, *, io_dtype=None, tb=None, tn=None,
                           force_n_tiling=False):
    """x_c, x_n: [B, C, N]. params: dict of weights (see init_params).

    io_dtype: optional narrower HBM I/O dtype (e.g. jnp.bfloat16) — the kernel
      is HBM-bound, so halving bytes/elem is ~2x throughput if the model
      tolerates it.  Compute stays in f32.
    tb / tn / force_n_tiling: overrides for testing."""
    assert x_c.shape == x_n.shape and x_c.ndim == 3
    B, C, N = x_c.shape
    Cr = params["w1"].shape[0]

    if io_dtype is not None:
        x_c = x_c.astype(io_dtype)
        x_n = x_n.astype(io_dtype)
    itemsize = jnp.dtype(x_c.dtype).itemsize
    out_dtype = x_c.dtype

    is_v7, is_v5e, vmem_cap = _tpu_info()
    budget, vmem_limit = _budgets(vmem_cap)

    # v5e has the lowest HBM BW and is the likeliest to expose DMA gaps between
    # grid steps; a third input buffer hides them (128 MiB VMEM affords it).
    in_bufs = 3 if (is_v5e and not is_v7) else 2

    # One-time weight prep in the wrapper (keep the kernel free of relayouts).
    w_sc = params["w_sc"].reshape(C, 1).astype(jnp.float32)   # (C, 1): C on sublanes
    w_sn = params["w_sn"].reshape(C, 1).astype(jnp.float32)
    w1t = params["w1"].T.astype(jnp.float32)                  # (C, Cr)
    w2t = params["w2"].T.astype(jnp.float32)                  # (Cr, C)
    bias = jnp.stack([params["b_sc"][0], params["b_sn"][0]]).astype(jnp.float32)  # (2,)

    bspec_smem = pl.BlockSpec(memory_space=pltpu.MemorySpace.SMEM)
    compiler_params_1d = pltpu.CompilerParams(
        dimension_semantics=("parallel",), vmem_limit_bytes=vmem_limit)

    if tb is not None:
        TB = int(min(max(1, tb), B))
    else:
        TB = _choose_batch_tile(B, C, N, itemsize, budget, is_v7, in_bufs)

    # ---------------- fast path: full-N slabs, batch-tiled cdiv grid ----------------
    if TB is not None and not force_n_tiling:
        return pl.pallas_call(
            _fused_kernel,
            out_shape=jax.ShapeDtypeStruct((B, C, N), out_dtype),
            grid_spec=pltpu.PrefetchScalarGridSpec(
                num_scalar_prefetch=0,
                grid=(_cdiv(B, TB),),
                in_specs=[
                    bspec_smem,                                       # bias
                    _x_spec((TB, C, N), lambda b: (b, 0, 0), in_bufs),  # x_c
                    _x_spec((TB, C, N), lambda b: (b, 0, 0), in_bufs),  # x_n
                    pl.BlockSpec((C, 1), lambda b: (0, 0)),            # w_sc
                    pl.BlockSpec((C, 1), lambda b: (0, 0)),            # w_sn
                    pl.BlockSpec((C, Cr), lambda b: (0, 0)),           # w1^T
                    pl.BlockSpec((Cr, C), lambda b: (0, 0)),           # w2^T
                ],
                out_specs=pl.BlockSpec((TB, C, N), lambda b: (b, 0, 0)),
            ),
            compiler_params=compiler_params_1d,
        )(bias, x_c, x_n, w_sc, w_sn, w1t, w2t)

    # ---------------- N-tiled two-pass path (large C*N) ----------------
    TN = _choose_n_tile(C, N, itemsize, budget, tn)
    n_steps = _cdiv(N, TN)
    needs_mask = (N % TN) != 0

    # Pass 1: per-(B, C) mean over N (scratch accumulator) -> SE channel attention.
    att_ch = pl.pallas_call(
        _make_reduce_kernel(N, TN, needs_mask),
        out_shape=jax.ShapeDtypeStruct((B, 1, C), jnp.float32),
        grid_spec=pltpu.PrefetchScalarGridSpec(
            num_scalar_prefetch=0,
            grid=(B, n_steps),
            in_specs=[
                bspec_smem,
                _x_spec((1, C, TN), lambda b, n: (b, 0, n), in_bufs),
                _x_spec((1, C, TN), lambda b, n: (b, 0, n), in_bufs),
                pl.BlockSpec((C, 1), lambda b, n: (0, 0)),
                pl.BlockSpec((C, 1), lambda b, n: (0, 0)),
                pl.BlockSpec((C, Cr), lambda b, n: (0, 0)),
                pl.BlockSpec((Cr, C), lambda b, n: (0, 0)),
            ],
            out_specs=pl.BlockSpec((1, 1, C), lambda b, n: (b, 0, 0)),
            scratch_shapes=[pltpu.VMEM((1, C), jnp.float32)],
        ),
        compiler_params=pltpu.CompilerParams(
            dimension_semantics=("parallel", "arbitrary"),
            vmem_limit_bytes=vmem_limit,
        ),
    )(bias, x_c, x_n, w_sc, w_sn, w1t, w2t)

    # Pass 2: recompute the elementwise fusion per tile and apply channel attention.
    return pl.pallas_call(
        _apply_kernel,
        out_shape=jax.ShapeDtypeStruct((B, C, N), out_dtype),
        grid_spec=pltpu.PrefetchScalarGridSpec(
            num_scalar_prefetch=0,
            grid=(B, n_steps),
            in_specs=[
                bspec_smem,
                _x_spec((1, C, TN), lambda b, n: (b, 0, n), in_bufs),
                _x_spec((1, C, TN), lambda b, n: (b, 0, n), in_bufs),
                pl.BlockSpec((C, 1), lambda b, n: (0, 0)),
                pl.BlockSpec((C, 1), lambda b, n: (0, 0)),
                pl.BlockSpec((1, 1, C), lambda b, n: (b, 0, 0)),
            ],
            out_specs=pl.BlockSpec((1, C, TN), lambda b, n: (b, 0, n)),
        ),
        compiler_params=pltpu.CompilerParams(
            dimension_semantics=("parallel", "parallel"),
            vmem_limit_bytes=vmem_limit,
        ),
    )(bias, x_c, x_n, w_sc, w_sn, att_ch)


# ----------------------------------------------------------------------------
# Params + pure-JAX reference (mirrors the PyTorch CrossFusionAttention.forward).
# ----------------------------------------------------------------------------
def init_params(key, C, reduction=4):
    Cr = C // reduction
    k = jax.random.split(key, 6)
    scale = 0.1
    return {
        # SpatialAttention (Conv1d C->1, k=1, bias=True): weight (1, C), bias (1,)
        "w_sc": scale * jax.random.normal(k[0], (1, C), jnp.float32),
        "b_sc": scale * jax.random.normal(k[1], (1,), jnp.float32),
        "w_sn": scale * jax.random.normal(k[2], (1, C), jnp.float32),
        "b_sn": scale * jax.random.normal(k[3], (1,), jnp.float32),
        # ChannelAttentionSE: Conv1d C->Cr (no bias), Conv1d Cr->C (no bias)
        "w1": scale * jax.random.normal(k[4], (Cr, C), jnp.float32),
        "w2": scale * jax.random.normal(k[5], (C, Cr), jnp.float32),
    }


def reference(x_c, x_n, p):
    att_c = jax.nn.sigmoid(jnp.einsum("oc,bcn->bon", p["w_sc"], x_c) + p["b_sc"][None, :, None])
    att_n = jax.nn.sigmoid(jnp.einsum("oc,bcn->bon", p["w_sn"], x_n) + p["b_sn"][None, :, None])
    x_tilde_n = x_n * att_c
    x_tilde_c = x_c * att_n
    f_sum = (x_c + x_tilde_c) + (x_n + x_tilde_n)
    y = jnp.mean(f_sum, axis=2, keepdims=True)                       # (B, C, 1)
    h = jnp.maximum(jnp.einsum("rc,bcx->brx", p["w1"], y), 0.0)
    att_ch = jax.nn.sigmoid(jnp.einsum("cr,brx->bcx", p["w2"], h))
    return f_sum * att_ch


if __name__ == "__main__":
    key = jax.random.PRNGKey(0)
    kx, kn, kp = jax.random.split(key, 3)

    B, C, N = 4, 8, 384
    x_c = jax.random.normal(kx, (B, C, N), jnp.float32)
    x_n = jax.random.normal(kn, (B, C, N), jnp.float32)
    params = init_params(kp, C, reduction=4)
    ref = reference(x_c, x_n, params)

    # 1) fast path (single fused kernel, batch-tiled grid).
    out = jax.block_until_ready(cross_fusion_attention(x_c, x_n, params))
    assert out.shape == (B, C, N)
    assert jnp.allclose(out, ref, atol=1e-5, rtol=1e-5), "fast path mismatch"

    # 2) fast path with a batch tile that does not divide B (cdiv grid, padded last block).
    out2 = jax.block_until_ready(cross_fusion_attention(x_c, x_n, params, tb=3))
    assert jnp.allclose(out2, ref, atol=1e-5, rtol=1e-5), "padded-batch path mismatch"

    # 3) forced two-pass N-tiled path (3 N tiles of 128).
    out3 = jax.block_until_ready(
        cross_fusion_attention(x_c, x_n, params, force_n_tiling=True, tn=128))
    assert jnp.allclose(out3, ref, atol=1e-5, rtol=1e-5), "n-tiled path mismatch"

    # 4) N-tiled path with ragged N (masked partial last tile).
    N2 = 200
    x_c2 = jax.random.normal(kx, (B, C, N2), jnp.float32)
    x_n2 = jax.random.normal(kn, (B, C, N2), jnp.float32)
    ref2 = reference(x_c2, x_n2, params)
    out4 = jax.block_until_ready(
        cross_fusion_attention(x_c2, x_n2, params, force_n_tiling=True, tn=128))
    assert jnp.allclose(out4, ref2, atol=1e-5, rtol=1e-5), "masked n-tiled path mismatch"

    print("KERNEL_OK")
</pallas_src>

<mosaic_0001>
module attributes {stable_mosaic.version = 11 : i64} {
  func.func @_fused_kernel(%arg0: i32, %arg1: memref<2xf32, #tpu.memory_space<smem>>, %arg2: memref<4x8x384xf32, #tpu.memory_space<vmem>>, %arg3: memref<4x8x384xf32, #tpu.memory_space<vmem>>, %arg4: memref<8x1xf32, #tpu.memory_space<vmem>>, %arg5: memref<8x1xf32, #tpu.memory_space<vmem>>, %arg6: memref<8x2xf32, #tpu.memory_space<vmem>>, %arg7: memref<2x8xf32, #tpu.memory_space<vmem>>, %arg8: memref<4x8x384xf32, #tpu.memory_space<vmem>>) attributes {dimension_semantics = [#tpu.dimension_semantics<parallel>], iteration_bounds = array<i64: 1>, scalar_prefetch = 0 : i64, scratch_operands = 0 : i64, tpu.core_type = #tpu.core_type<tc>, window_params = [{transform_indices = @transform_0, window_bounds = array<i64: 2>}, {transform_indices = @transform_1, window_bounds = array<i64: 4, 8, 384>}, {transform_indices = @transform_2, window_bounds = array<i64: 4, 8, 384>}, {pipeline_mode = #tpu.pipeline_mode<synchronous>, transform_indices = @transform_3, window_bounds = array<i64: 8, 1>}, {pipeline_mode = #tpu.pipeline_mode<synchronous>, transform_indices = @transform_4, window_bounds = array<i64: 8, 1>}, {pipeline_mode = #tpu.pipeline_mode<synchronous>, transform_indices = @transform_5, window_bounds = array<i64: 8, 2>}, {pipeline_mode = #tpu.pipeline_mode<synchronous>, transform_indices = @transform_6, window_bounds = array<i64: 2, 8>}, {transform_indices = @transform_7, window_bounds = array<i64: 4, 8, 384>}]} {
    %c0 = arith.constant 0 : index
    %0 = memref.load %arg1[%c0] : memref<2xf32, #tpu.memory_space<smem>>
    %c1 = arith.constant 1 : index
    %1 = memref.load %arg1[%c1] : memref<2xf32, #tpu.memory_space<smem>>
    %c0_0 = arith.constant 0 : index
    %c0_1 = arith.constant 0 : index
    %c0_2 = arith.constant 0 : index
    %2 = vector.load %arg2[%c0_0, %c0_1, %c0_2] : memref<4x8x384xf32, #tpu.memory_space<vmem>>, vector<4x8x384xf32>
    %c0_3 = arith.constant 0 : index
    %c0_4 = arith.constant 0 : index
    %c0_5 = arith.constant 0 : index
    %3 = vector.load %arg3[%c0_3, %c0_4, %c0_5] : memref<4x8x384xf32, #tpu.memory_space<vmem>>, vector<4x8x384xf32>
    %c0_6 = arith.constant 0 : index
    %c0_7 = arith.constant 0 : index
    %4 = vector.load %arg4[%c0_6, %c0_7] : memref<8x1xf32, #tpu.memory_space<vmem>>, vector<8x1xf32>
    %5 = vector.shape_cast %4 : vector<8x1xf32> to vector<1x8x1xf32>
    %c0_8 = arith.constant 0 : index
    %c0_9 = arith.constant 0 : index
    %6 = vector.load %arg5[%c0_8, %c0_9] : memref<8x1xf32, #tpu.memory_space<vmem>>, vector<8x1xf32>
    %7 = vector.shape_cast %6 : vector<8x1xf32> to vector<1x8x1xf32>
    %8 = vector.broadcast %5 : vector<1x8x1xf32> to vector<4x8x384xf32>
    %9 = arith.mulf %2, %8 : vector<4x8x384xf32>
    %cst = arith.constant dense<0.000000e+00> : vector<4x384xf32>
    %10 = vector.multi_reduction <add>, %9, %cst [1] : vector<4x8x384xf32> to vector<4x384xf32>
    %11 = vector.shape_cast %10 : vector<4x384xf32> to vector<4x1x384xf32>
    %12 = vector.broadcast %0 : f32 to vector<4x1x384xf32>
    %13 = arith.addf %11, %12 : vector<4x1x384xf32>
    %14 = arith.negf %13 : vector<4x1x384xf32>
    %15 = math.exp %14 : vector<4x1x384xf32>
    %cst_10 = arith.constant 1.000000e+00 : f32
    %16 = vector.broadcast %cst_10 : f32 to vector<4x1x384xf32>
    %17 = arith.addf %16, %15 : vector<4x1x384xf32>
    %18 = arith.divf %16, %17 : vector<4x1x384xf32>
    %19 = vector.broadcast %7 : vector<1x8x1xf32> to vector<4x8x384xf32>
    %20 = arith.mulf %3, %19 : vector<4x8x384xf32>
    %cst_11 = arith.constant dense<0.000000e+00> : vector<4x384xf32>
    %21 = vector.multi_reduction <add>, %20, %cst_11 [1] : vector<4x8x384xf32> to vector<4x384xf32>
    %22 = vector.shape_cast %21 : vector<4x384xf32> to vector<4x1x384xf32>
    %23 = vector.broadcast %1 : f32 to vector<4x1x384xf32>
    %24 = arith.addf %22, %23 : vector<4x1x384xf32>
    %25 = arith.negf %24 : vector<4x1x384xf32>
    %26 = math.exp %25 : vector<4x1x384xf32>
    %cst_12 = arith.constant 1.000000e+00 : f32
    %27 = vector.broadcast %cst_12 : f32 to vector<4x1x384xf32>
    %28 = arith.addf %27, %26 : vector<4x1x384xf32>
    %29 = arith.divf %27, %28 : vector<4x1x384xf32>
    %cst_13 = arith.constant 1.000000e+00 : f32
    %30 = vector.broadcast %cst_13 : f32 to vector<4x1x384xf32>
    %31 = arith.addf %30, %29 : vector<4x1x384xf32>
    %32 = vector.broadcast %31 : vector<4x1x384xf32> to vector<4x8x384xf32>
    %33 = arith.mulf %2, %32 : vector<4x8x384xf32>
    %cst_14 = arith.constant 1.000000e+00 : f32
    %34 = vector.broadcast %cst_14 : f32 to vector<4x1x384xf32>
    %35 = arith.addf %34, %18 : vector<4x1x384xf32>
    %36 = vector.broadcast %35 : vector<4x1x384xf32> to vector<4x8x384xf32>
    %37 = arith.mulf %3, %36 : vector<4x8x384xf32>
    %38 = arith.addf %33, %37 : vector<4x8x384xf32>
    %cst_15 = arith.constant dense<0.000000e+00> : vector<4x8xf32>
    %39 = vector.multi_reduction <add>, %38, %cst_15 [2] : vector<4x8x384xf32> to vector<4x8xf32>
    %cst_16 = arith.constant 3.840000e+02 : f32
    %40 = vector.broadcast %cst_16 : f32 to vector<4x8xf32>
    %41 = arith.divf %39, %40 : vector<4x8xf32>
    %c0_17 = arith.constant 0 : index
    %c0_18 = arith.constant 0 : index
    %42 = vector.load %arg6[%c0_17, %c0_18] : memref<8x2xf32, #tpu.memory_space<vmem>>, vector<8x2xf32>
    %cst_19 = arith.constant dense<0.000000e+00> : vector<4x2xf32>
    %43 = tpu.matmul %41, %42, %cst_19 {dimension_numbers = #tpu.dot_dimension_numbers<[1], [0], [0], [1], [0, 0, 1, 1], [], []>} : vector<4x8xf32>, vector<8x2xf32>, vector<4x2xf32> -> vector<4x2xf32>
    %cst_20 = arith.constant 0.000000e+00 : f32
    %44 = vector.broadcast %cst_20 : f32 to vector<4x2xf32>
    %45 = arith.maximumf %43, %44 : vector<4x2xf32>
    %c0_21 = arith.constant 0 : index
    %c0_22 = arith.constant 0 : index
    %46 = vector.load %arg7[%c0_21, %c0_22] : memref<2x8xf32, #tpu.memory_space<vmem>>, vector<2x8xf32>
    %cst_23 = arith.constant dense<0.000000e+00> : vector<4x8xf32>
    %47 = tpu.matmul %45, %46, %cst_23 {dimension_numbers = #tpu.dot_dimension_numbers<[1], [0], [0], [1], [0, 0, 1, 1], [], []>} : vector<4x2xf32>, vector<2x8xf32>, vector<4x8xf32> -> vector<4x8xf32>
    %48 = arith.negf %47 : vector<4x8xf32>
    %49 = math.exp %48 : vector<4x8xf32>
    %cst_24 = arith.constant 1.000000e+00 : f32
    %50 = vector.broadcast %cst_24 : f32 to vector<4x8xf32>
    %51 = arith.addf %50, %49 : vector<4x8xf32>
    %52 = arith.divf %50, %51 : vector<4x8xf32>
    %53 = vector.shape_cast %52 : vector<4x8xf32> to vector<4x8x1xf32>
    %54 = vector.broadcast %53 : vector<4x8x1xf32> to vector<4x8x384xf32>
    %55 = arith.mulf %38, %54 : vector<4x8x384xf32>
    %c0_25 = arith.constant 0 : index
    %c0_26 = arith.constant 0 : index
    %c0_27 = arith.constant 0 : index
    %56 = vector.load %arg8[%c0_25, %c0_26, %c0_27] : memref<4x8x384xf32, #tpu.memory_space<vmem>>, vector<4x8x384xf32>
    tpu.vector_store %arg8[%c0_25, %c0_26, %c0_27], %55 {strides = array<i32>} : memref<4x8x384xf32, #tpu.memory_space<vmem>>, vector<4x8x384xf32>,
    return
  }
  func.func @transform_0(%arg0: i32) -> i32 {
    %c0_i32 = arith.constant 0 : i32
    %c0_i32_0 = arith.constant 0 : i32
    return %c0_i32 : i32
  }
  func.func @transform_1(%arg0: i32) -> (i32, i32, i32) {
    %c0_i32 = arith.constant 0 : i32
    %c0_i32_0 = arith.constant 0 : i32
    %c0_i32_1 = arith.constant 0 : i32
    return %arg0, %c0_i32, %c0_i32_0 : i32, i32, i32
  }
  func.func @transform_2(%arg0: i32) -> (i32, i32, i32) {
    %c0_i32 = arith.constant 0 : i32
    %c0_i32_0 = arith.constant 0 : i32
    %c0_i32_1 = arith.constant 0 : i32
    return %arg0, %c0_i32, %c0_i32_0 : i32, i32, i32
  }
  func.func @transform_3(%arg0: i32) -> (i32, i32) {
    %c0_i32 = arith.constant 0 : i32
    %c0_i32_0 = arith.constant 0 : i32
    %c0_i32_1 = arith.constant 0 : i32
    return %c0_i32, %c0_i32_0 : i32, i32
  }
  func.func @transform_4(%arg0: i32) -> (i32, i32) {
    %c0_i32 = arith.constant 0 : i32
    %c0_i32_0 = arith.constant 0 : i32
    %c0_i32_1 = arith.constant 0 : i32
    return %c0_i32, %c0_i32_0 : i32, i32
  }
  func.func @transform_5(%arg0: i32) -> (i32, i32) {
    %c0_i32 = arith.constant 0 : i32
    %c0_i32_0 = arith.constant 0 : i32
    %c0_i32_1 = arith.constant 0 : i32
    return %c0_i32, %c0_i32_0 : i32, i32
  }
  func.func @transform_6(%arg0: i32) -> (i32, i32) {
    %c0_i32 = arith.constant 0 : i32
    %c0_i32_0 = arith.constant 0 : i32
    %c0_i32_1 = arith.constant 0 : i32
    return %c0_i32, %c0_i32_0 : i32, i32
  }
  func.func @transform_7(%arg0: i32) -> (i32, i32, i32) {
    %c0_i32 = arith.constant 0 : i32
    %c0_i32_0 = arith.constant 0 : i32
    %c0_i32_1 = arith.constant 0 : i32
    return %arg0, %c0_i32, %c0_i32_0 : i32, i32, i32
  }
}

</mosaic_0001>

<llo_original>
// kernel: tpu_custom_call.1
$region0: #{tpu_custom_call.1}
  #allocation0 [shape = 'u32[]', space=smem, size = 0x4, offset = 0x4, fixed_abs, tag = 'smem constant byte address 0x4 - core index']
  #allocation1 [shape = 'u32[72,128]{1,0:T(1,128)}', space=vmem, size = 0x9000, scoped, tag = 'internal scratch']
  %s0 = inlined_call_operand.vmem [shape: f32[2], index: 0, kind: input, shape index: {}]
  %s1 = inlined_call_operand.hbm [shape: f32[4,8,384], index: 1, kind: input, shape index: {}]
  %s2 = inlined_call_operand.hbm [shape: f32[4,8,384], index: 2, kind: input, shape index: {}]
  %s3 = inlined_call_operand.vmem [shape: f32[8,1], index: 3, kind: input, shape index: {}]
  %s4 = inlined_call_operand.vmem [shape: f32[8,1], index: 4, kind: input, shape index: {}]
  %s5 = inlined_call_operand.vmem [shape: f32[8,2], index: 5, kind: input, shape index: {}]
  %s6 = inlined_call_operand.vmem [shape: f32[2,8], index: 6, kind: input, shape index: {}]
  %s7 = inlined_call_operand.hbm [shape: f32[4,8,384], index: 7, kind: output, shape index: {}]
  %s8 = sld [smem:[#allocation0]]
  $region50: #{tpu_custom_call.1} parent=0
    _
  %s10 = ssub.s32 1, %s8
  %s11 = scalar_select 0, %s10, %s8
  $region1: #{tpu_custom_call.1} parent=0
    #allocation2 [shape = 'u8[512]{0}', space=smem, size = 0x200, scoped, tag = 'input window, operand 0, single buffered']
    #allocation3 [shape = 's32[1]{0}', space=sflag, size = 0x4, scoped, tag = 'scoped memory for tpu_custom_call.1']
    #allocation4 [shape = 's32[1]{0}', space=sflag, size = 0x4, scoped, tag = 'scoped memory for tpu_custom_call.1']
    #allocation5 [shape = 's32[1]{0}', space=sflag, size = 0x4, scoped, tag = 'scoped memory for tpu_custom_call.1']
    #allocation6 [shape = 'u8[49152]{0}', space=vmem, size = 0xc000, scoped, tag = 'input window, operand 1, single buffered']
    #allocation7 [shape = 'u8[49152]{0}', space=vmem, size = 0xc000, scoped, tag = 'input window, operand 2, single buffered']
    #allocation8 [shape = 's32[1]{0}', space=sflag, size = 0x4, scoped, tag = 'scoped memory for tpu_custom_call.1']
    #allocation9 [shape = 'u8[49152]{0}', space=vmem, size = 0xc000, scoped, tag = 'output window, operand 0, single buffered']
    %12 = vsyncpa [#allocation5], 0
    %13 = vsyncpa [#allocation3], 0
    %14 = vsyncpa [#allocation8], 0
    %15 = vsyncpa [#allocation4], 0
    // Predicated region
    $region2: #{tpu_custom_call.1} parent=1 // pred_check
      _
    $region3: #{tpu_custom_call.1} parent=1 // pred_check_branch
      %17 = sbr.rel (0) target = $region5
    $region4: #{tpu_custom_call.1} parent=1 // pred_region
      %19 = vsyncadd [#allocation5], 0
      %s21 = sshll.u32 %s0, 4
      %s22 = int_to_ptr.vmem [resolvable:$true] %s21
      %24 = dma.vmem_to_smem %s22, 16, [#allocation2], [#allocation5]
    $region5: #{tpu_custom_call.1} parent=1 // pred_fallthru
      _
    // Predicated region
    $region6: #{tpu_custom_call.1} parent=1 // pred_check
      _
    $region7: #{tpu_custom_call.1} parent=1 // pred_check_branch
      %26 = sbr.rel (0) target = $region9
    $region8: #{tpu_custom_call.1} parent=1 // pred_region
      %28 = vsyncadd [#allocation3], 0
      %s29 = sshll.u32 %s1, 4
      %s30 = int_to_ptr.hbm [resolvable:$true] %s29
      %s31 = sshll.u32 [#allocation6], 4
      %s32 = int_to_ptr.vmem [resolvable:$true] %s31
      %37 = dma.hbm_to_vmem [thread:$0]  %s30, 1536, %s32, [#allocation3], 384, 384, 24
    $region9: #{tpu_custom_call.1} parent=1 // pred_fallthru
      _
    // Predicated region
    $region10: #{tpu_custom_call.1} parent=1 // pred_check
      _
    $region11: #{tpu_custom_call.1} parent=1 // pred_check_branch
      %39 = sbr.rel (0) target = $region13
    $region12: #{tpu_custom_call.1} parent=1 // pred_region
      %41 = vsyncadd [#allocation8], 0
      %s42 = sshll.u32 %s2, 4
      %s43 = int_to_ptr.hbm [resolvable:$true] %s42
      %s44 = sshll.u32 [#allocation7], 4
      %s45 = int_to_ptr.vmem [resolvable:$true] %s44
      %50 = dma.hbm_to_vmem [thread:$0]  %s43, 1536, %s45, [#allocation8], 384, 384, 24
    $region13: #{tpu_custom_call.1} parent=1 // pred_fallthru
      _
    // Predicated region
    $region14: #{tpu_custom_call.1} parent=1 // pred_check
      _
    $region15: #{tpu_custom_call.1} parent=1 // pred_check_branch
      %52 = sbr.rel (0) target = $region17
    $region16: #{tpu_custom_call.1} parent=1 // pred_region
      _
    $region17: #{tpu_custom_call.1} parent=1 // pred_fallthru
      _
    // Predicated region
    $region18: #{tpu_custom_call.1} parent=1 // pred_check
      _
    $region19: #{tpu_custom_call.1} parent=1 // pred_check_branch
      %54 = sbr.rel (0) target = $region21
    $region20: #{tpu_custom_call.1} parent=1 // pred_region
      _
    $region21: #{tpu_custom_call.1} parent=1 // pred_fallthru
      _
    // Predicated region
    $region22: #{tpu_custom_call.1} parent=1 // pred_check
      _
    $region23: #{tpu_custom_call.1} parent=1 // pred_check_branch
      %56 = sbr.rel (0) target = $region25
    $region24: #{tpu_custom_call.1} parent=1 // pred_region
      _
    $region25: #{tpu_custom_call.1} parent=1 // pred_fallthru
      _
    // Predicated region
    $region26: #{tpu_custom_call.1} parent=1 // pred_check
      _
    $region27: #{tpu_custom_call.1} parent=1 // pred_check_branch
      %58 = sbr.rel (0) target = $region29
    $region28: #{tpu_custom_call.1} parent=1 // pred_region
      _
    $region29: #{tpu_custom_call.1} parent=1 // pred_fallthru
      _
    // Predicated region
    $region30: #{tpu_custom_call.1} parent=1 // pred_check
      _
    $region31: #{tpu_custom_call.1} parent=1 // pred_check_branch
      %60 = sbr.rel (0) target = $region33
    $region32: #{tpu_custom_call.1} parent=1 // pred_region
      %62 = dma.done [#allocation5], 16
    $region33: #{tpu_custom_call.1} parent=1 // pred_fallthru
      _
    // Predicated region
    $region34: #{tpu_custom_call.1} parent=1 // pred_check
      _
    $region35: #{tpu_custom_call.1} parent=1 // pred_check_branch
      %64 = sbr.rel (0) target = $region37
    $region36: #{tpu_custom_call.1} parent=1 // pred_region
      %66 = dma.done [#allocation3], 1536
    $region37: #{tpu_custom_call.1} parent=1 // pred_fallthru
      _
    // Predicated region
    $region38: #{tpu_custom_call.1} parent=1 // pred_check
      _
    $region39: #{tpu_custom_call.1} parent=1 // pred_check_branch
      %68 = sbr.rel (0) target = $region41
    $region40: #{tpu_custom_call.1} parent=1 // pred_region
      %70 = dma.done [#allocation8], 1536
    $region41: #{tpu_custom_call.1} parent=1 // pred_fallthru
      _
    %71 = sfence
    %s72 = sld [smem:[#allocation2]]
    %s73 = sld [smem:[#allocation2 + $0x1]]
    %v74 = vld [vmem:[#allocation6] sm:$0xff]
    %v75 = vld [vmem:[#allocation6 + $0x8] sm:$0xff]
    %v76 = vld [vmem:[#allocation6 + $0x10] sm:$0xff]
    %v77 = vld [vmem:[#allocation6 + $0x18] sm:$0xff]
    %v78 = vld [vmem:[#allocation6 + $0x20] sm:$0xff]
    %v79 = vld [vmem:[#allocation6 + $0x28] sm:$0xff]
    %v80 = vld [vmem:[#allocation6 + $0x30] sm:$0xff]
    %v81 = vld [vmem:[#allocation6 + $0x38] sm:$0xff]
    %v82 = vld [vmem:[#allocation6 + $0x40] sm:$0xff]
    %v83 = vld [vmem:[#allocation6 + $0x48] sm:$0xff]
    %v84 = vld [vmem:[#allocation6 + $0x50] sm:$0xff]
    %v85 = vld [vmem:[#allocation6 + $0x58] sm:$0xff]
    %v86 = vld [vmem:[#allocation7] sm:$0xff]
    %v87 = vld [vmem:[#allocation7 + $0x8] sm:$0xff]
    %v88 = vld [vmem:[#allocation7 + $0x10] sm:$0xff]
    %v89 = vld [vmem:[#allocation7 + $0x18] sm:$0xff]
    %v90 = vld [vmem:[#allocation7 + $0x20] sm:$0xff]
    %v91 = vld [vmem:[#allocation7 + $0x28] sm:$0xff]
    %v92 = vld [vmem:[#allocation7 + $0x30] sm:$0xff]
    %v93 = vld [vmem:[#allocation7 + $0x38] sm:$0xff]
    %v94 = vld [vmem:[#allocation7 + $0x40] sm:$0xff]
    %v95 = vld [vmem:[#allocation7 + $0x48] sm:$0xff]
    %v96 = vld [vmem:[#allocation7 + $0x50] sm:$0xff]
    %v97 = vld [vmem:[#allocation7 + $0x58] sm:$0xff]
    %v98 = vld [vmem:[%s3] sm:$0xff]
    %v99 = vld [vmem:[%s4] sm:$0xff]
    %101 = vset.pattern.permute.xlu0 0
    %102 = vperm.xlu0 %101, %v98
    %v103 = vpop.permute.xlu0 %102
    %v105 = vmul.f32 %v74, %v103
    %v106 = vmul.f32 %v75, %v103
    %v107 = vmul.f32 %v76, %v103
    %v108 = vmul.f32 %v77, %v103
    %v109 = vmul.f32 %v78, %v103
    %v110 = vmul.f32 %v79, %v103
    %v111 = vmul.f32 %v80, %v103
    %v112 = vmul.f32 %v81, %v103
    %v113 = vmul.f32 %v82, %v103
    %v114 = vmul.f32 %v83, %v103
    %v115 = vmul.f32 %v84, %v103
    %v116 = vmul.f32 %v85, %v103
    %v117 = vrot.slane %v105, 4
    %v118 = vadd.f32 %v105, %v117
    %v119 = vrot.slane %v118, 2
    %v120 = vadd.f32 %v118, %v119
    %v121 = vrot.slane %v120, 1
    %v122 = vadd.f32 %v120, %v121
    %v123 = vrot.slane %v106, 4
    %v124 = vadd.f32 %v106, %v123
    %v125 = vrot.slane %v124, 2
    %v126 = vadd.f32 %v124, %v125
    %v127 = vrot.slane %v126, 1
    %v128 = vadd.f32 %v126, %v127
    %v129 = vrot.slane %v107, 4
    %v130 = vadd.f32 %v107, %v129
    %v131 = vrot.slane %v130, 2
    %v132 = vadd.f32 %v130, %v131
    %v133 = vrot.slane %v132, 1
    %v134 = vadd.f32 %v132, %v133
    %v135 = vrot.slane %v108, 4
    %v136 = vadd.f32 %v108, %v135
    %v137 = vrot.slane %v136, 2
    %v138 = vadd.f32 %v136, %v137
    %v139 = vrot.slane %v138, 1
    %v140 = vadd.f32 %v138, %v139
    %v141 = vrot.slane %v109, 4
    %v142 = vadd.f32 %v109, %v141
    %v143 = vrot.slane %v142, 2
    %v144 = vadd.f32 %v142, %v143
    %v145 = vrot.slane %v144, 1
    %v146 = vadd.f32 %v144, %v145
    %v147 = vrot.slane %v110, 4
    %v148 = vadd.f32 %v110, %v147
    %v149 = vrot.slane %v148, 2
    %v150 = vadd.f32 %v148, %v149
    %v151 = vrot.slane %v150, 1
    %v152 = vadd.f32 %v150, %v151
    %v153 = vrot.slane %v111, 4
    %v154 = vadd.f32 %v111, %v153
    %v155 = vrot.slane %v154, 2
    %v156 = vadd.f32 %v154, %v155
    %v157 = vrot.slane %v156, 1
    %v158 = vadd.f32 %v156, %v157
    %v159 = vrot.slane %v112, 4
    %v160 = vadd.f32 %v112, %v159
    %v161 = vrot.slane %v160, 2
    %v162 = vadd.f32 %v160, %v161
    %v163 = vrot.slane %v162, 1
    %v164 = vadd.f32 %v162, %v163
    %v165 = vrot.slane %v113, 4
    %v166 = vadd.f32 %v113, %v165
    %v167 = vrot.slane %v166, 2
    %v168 = vadd.f32 %v166, %v167
    %v169 = vrot.slane %v168, 1
    %v170 = vadd.f32 %v168, %v169
    %v171 = vrot.slane %v114, 4
    %v172 = vadd.f32 %v114, %v171
    %v173 = vrot.slane %v172, 2
    %v174 = vadd.f32 %v172, %v173
    %v175 = vrot.slane %v174, 1
    %v176 = vadd.f32 %v174, %v175
    %v177 = vrot.slane %v115, 4
    %v178 = vadd.f32 %v115, %v177
    %v179 = vrot.slane %v178, 2
    %v180 = vadd.f32 %v178, %v179
    %v181 = vrot.slane %v180, 1
    %v182 = vadd.f32 %v180, %v181
    %v183 = vrot.slane %v116, 4
    %v184 = vadd.f32 %v116, %v183
    %v185 = vrot.slane %v184, 2
    %v186 = vadd.f32 %v184, %v185
    %v187 = vrot.slane %v186, 1
    %v188 = vadd.f32 %v186, %v187
    %v189 = vstv %s72
    %v190 = vadd.f32 %v122, %v189
    %v191 = vadd.f32 %v128, %v189
    %v192 = vadd.f32 %v134, %v189
    %v193 = vadd.f32 %v140, %v189
    %v194 = vadd.f32 %v146, %v189
    %v195 = vadd.f32 %v152, %v189
    %v196 = vadd.f32 %v158, %v189
    %v197 = vadd.f32 %v164, %v189
    %v198 = vadd.f32 %v170, %v189
    %v199 = vadd.f32 %v176, %v189
    %v200 = vadd.f32 %v182, %v189
    %v201 = vadd.f32 %v188, %v189
    %v202 = vxor.u32 %v190, 2147483648
    %v203 = vxor.u32 %v191, 2147483648
    %v204 = vxor.u32 %v192, 2147483648
    %v205 = vxor.u32 %v193, 2147483648
    %v206 = vxor.u32 %v194, 2147483648
    %v207 = vxor.u32 %v195, 2147483648
    %v208 = vxor.u32 %v196, 2147483648
    %v209 = vxor.u32 %v197, 2147483648
    %v210 = vxor.u32 %v198, 2147483648
    %v211 = vxor.u32 %v199, 2147483648
    %v212 = vxor.u32 %v200, 2147483648
    %v213 = vxor.u32 %v201, 2147483648
    %v214 = vmul.f32 %v202, 1.442695
    %v215 = vpow.pop %v214
    %v216 = vmul.f32 %v203, 1.442695
    %v217 = vpow.pop %v216
    %v218 = vmul.f32 %v204, 1.442695
    %v219 = vpow.pop %v218
    %v220 = vmul.f32 %v205, 1.442695
    %v221 = vpow.pop %v220
    %v222 = vmul.f32 %v206, 1.442695
    %v223 = vpow.pop %v222
    %v224 = vmul.f32 %v207, 1.442695
    %v225 = vpow.pop %v224
    %v226 = vmul.f32 %v208, 1.442695
    %v227 = vpow.pop %v226
    %v228 = vmul.f32 %v209, 1.442695
    %v229 = vpow.pop %v228
    %v230 = vmul.f32 %v210, 1.442695
    %v231 = vpow.pop %v230
    %v232 = vmul.f32 %v211, 1.442695
    %v233 = vpow.pop %v232
    %v234 = vmul.f32 %v212, 1.442695
    %v235 = vpow.pop %v234
    %v236 = vmul.f32 %v213, 1.442695
    %v237 = vpow.pop %v236
    %v238 = vadd.f32 %v215, 1.0
    %v239 = vadd.f32 %v217, 1.0
    %v240 = vadd.f32 %v219, 1.0
    %v241 = vadd.f32 %v221, 1.0
    %v242 = vadd.f32 %v223, 1.0
    %v243 = vadd.f32 %v225, 1.0
    %v244 = vadd.f32 %v227, 1.0
    %v245 = vadd.f32 %v229, 1.0
    %v246 = vadd.f32 %v231, 1.0
    %v247 = vadd.f32 %v233, 1.0
    %v248 = vadd.f32 %v235, 1.0
    %v249 = vadd.f32 %v237, 1.0
    %v250 = vrcp.pop %v238
    %v251 = vmul.f32 %v238, %v250
    %v252 = vsub.f32 1.0, %v251
    %v253 = vmul.f32 %v250, %v252
    %v254 = vadd.f32 %v250, %v253
    %vm255 = vweird.f32 %v238
    %vm256 = vweird.f32 %v250
    %vm257 = vmor %vm255, %vm256
    %v258 = vsel %vm257, %v250, %v254
    %v259 = vand.u32 2147483647, %v238
    %vm260 = vcmp.eq.f32.partialorder %v259, 8.507059e+37
    %v261 = vand.u32 %v238, 2147483648
    %v262 = vor.u32 1.1754944e-38, %v261
    %v263 = vsel %vm260, %v262, %v258
    %v264 = vmul.f32 1.0, %v263
    %v265 = vrcp.pop %v239
    %v266 = vmul.f32 %v239, %v265
    %v267 = vsub.f32 1.0, %v266
    %v268 = vmul.f32 %v265, %v267
    %v269 = vadd.f32 %v265, %v268
    %vm270 = vweird.f32 %v239
    %vm271 = vweird.f32 %v265
    %vm272 = vmor %vm270, %vm271
    %v273 = vsel %vm272, %v265, %v269
    %v274 = vand.u32 2147483647, %v239
    %vm275 = vcmp.eq.f32.partialorder %v274, 8.507059e+37
    %v276 = vand.u32 %v239, 2147483648
    %v277 = vor.u32 1.1754944e-38, %v276
    %v278 = vsel %vm275, %v277, %v273
    %v279 = vmul.f32 1.0, %v278
    %v280 = vrcp.pop %v240
    %v281 = vmul.f32 %v240, %v280
    %v282 = vsub.f32 1.0, %v281
    %v283 = vmul.f32 %v280, %v282
    %v284 = vadd.f32 %v280, %v283
    %vm285 = vweird.f32 %v240
    %vm286 = vweird.f32 %v280
    %vm287 = vmor %vm285, %vm286
    %v288 = vsel %vm287, %v280, %v284
    %v289 = vand.u32 2147483647, %v240
    %vm290 = vcmp.eq.f32.partialorder %v289, 8.507059e+37
    %v291 = vand.u32 %v240, 2147483648
    %v292 = vor.u32 1.1754944e-38, %v291
    %v293 = vsel %vm290, %v292, %v288
    %v294 = vmul.f32 1.0, %v293
    %v295 = vrcp.pop %v241
    %v296 = vmul.f32 %v241, %v295
    %v297 = vsub.f32 1.0, %v296
    %v298 = vmul.f32 %v295, %v297
    %v299 = vadd.f32 %v295, %v298
    %vm300 = vweird.f32 %v241
    %vm301 = vweird.f32 %v295
    %vm302 = vmor %vm300, %vm301
    %v303 = vsel %vm302, %v295, %v299
    %v304 = vand.u32 2147483647, %v241
    %vm305 = vcmp.eq.f32.partialorder %v304, 8.507059e+37
    %v306 = vand.u32 %v241, 2147483648
    %v307 = vor.u32 1.1754944e-38, %v306
    %v308 = vsel %vm305, %v307, %v303
    %v309 = vmul.f32 1.0, %v308
    %v310 = vrcp.pop %v242
    %v311 = vmul.f32 %v242, %v310
    %v312 = vsub.f32 1.0, %v311
    %v313 = vmul.f32 %v310, %v312
    %v314 = vadd.f32 %v310, %v313
    %vm315 = vweird.f32 %v242
    %vm316 = vweird.f32 %v310
    %vm317 = vmor %vm315, %vm316
    %v318 = vsel %vm317, %v310, %v314
    %v319 = vand.u32 2147483647, %v242
    %vm320 = vcmp.eq.f32.partialorder %v319, 8.507059e+37
    %v321 = vand.u32 %v242, 2147483648
    %v322 = vor.u32 1.1754944e-38, %v321
    %v323 = vsel %vm320, %v322, %v318
    %v324 = vmul.f32 1.0, %v323
    %v325 = vrcp.pop %v243
    %v326 = vmul.f32 %v243, %v325
    %v327 = vsub.f32 1.0, %v326
    %v328 = vmul.f32 %v325, %v327
    %v329 = vadd.f32 %v325, %v328
    %vm330 = vweird.f32 %v243
    %vm331 = vweird.f32 %v325
    %vm332 = vmor %vm330, %vm331
    %v333 = vsel %vm332, %v325, %v329
    %v334 = vand.u32 2147483647, %v243
    %vm335 = vcmp.eq.f32.partialorder %v334, 8.507059e+37
    %v336 = vand.u32 %v243, 2147483648
    %v337 = vor.u32 1.1754944e-38, %v336
    %v338 = vsel %vm335, %v337, %v333
    %v339 = vmul.f32 1.0, %v338
    %v340 = vrcp.pop %v244
    %v341 = vmul.f32 %v244, %v340
    %v342 = vsub.f32 1.0, %v341
    %v343 = vmul.f32 %v340, %v342
    %v344 = vadd.f32 %v340, %v343
    %vm345 = vweird.f32 %v244
    %vm346 = vweird.f32 %v340
    %vm347 = vmor %vm345, %vm346
    %v348 = vsel %vm347, %v340, %v344
    %v349 = vand.u32 2147483647, %v244
    %vm350 = vcmp.eq.f32.partialorder %v349, 8.507059e+37
    %v351 = vand.u32 %v244, 2147483648
    %v352 = vor.u32 1.1754944e-38, %v351
    %v353 = vsel %vm350, %v352, %v348
    %v354 = vmul.f32 1.0, %v353
    %v355 = vrcp.pop %v245
    %v356 = vmul.f32 %v245, %v355
    %v357 = vsub.f32 1.0, %v356
    %v358 = vmul.f32 %v355, %v357
    %v359 = vadd.f32 %v355, %v358
    %vm360 = vweird.f32 %v245
    %vm361 = vweird.f32 %v355
    %vm362 = vmor %vm360, %vm361
    %v363 = vsel %vm362, %v355, %v359
    %v364 = vand.u32 2147483647, %v245
    %vm365 = vcmp.eq.f32.partialorder %v364, 8.507059e+37
    %v366 = vand.u32 %v245, 2147483648
    %v367 = vor.u32 1.1754944e-38, %v366
    %v368 = vsel %vm365, %v367, %v363
    %v369 = vmul.f32 1.0, %v368
    %v370 = vrcp.pop %v246
    %v371 = vmul.f32 %v246, %v370
    %v372 = vsub.f32 1.0, %v371
    %v373 = vmul.f32 %v370, %v372
    %v374 = vadd.f32 %v370, %v373
    %vm375 = vweird.f32 %v246
    %vm376 = vweird.f32 %v370
    %vm377 = vmor %vm375, %vm376
    %v378 = vsel %vm377, %v370, %v374
    %v379 = vand.u32 2147483647, %v246
    %vm380 = vcmp.eq.f32.partialorder %v379, 8.507059e+37
    %v381 = vand.u32 %v246, 2147483648
    %v382 = vor.u32 1.1754944e-38, %v381
    %v383 = vsel %vm380, %v382, %v378
    %v384 = vmul.f32 1.0, %v383
    %v385 = vrcp.pop %v247
    %v386 = vmul.f32 %v247, %v385
    %v387 = vsub.f32 1.0, %v386
    %v388 = vmul.f32 %v385, %v387
    %v389 = vadd.f32 %v385, %v388
    %vm390 = vweird.f32 %v247
    %vm391 = vweird.f32 %v385
    %vm392 = vmor %vm390, %vm391
    %v393 = vsel %vm392, %v385, %v389
    %v394 = vand.u32 2147483647, %v247
    %vm395 = vcmp.eq.f32.partialorder %v394, 8.507059e+37
    %v396 = vand.u32 %v247, 2147483648
    %v397 = vor.u32 1.1754944e-38, %v396
    %v398 = vsel %vm395, %v397, %v393
    %v399 = vmul.f32 1.0, %v398
    %v400 = vrcp.pop %v248
    %v401 = vmul.f32 %v248, %v400
    %v402 = vsub.f32 1.0, %v401
    %v403 = vmul.f32 %v400, %v402
    %v404 = vadd.f32 %v400, %v403
    %vm405 = vweird.f32 %v248
    %vm406 = vweird.f32 %v400
    %vm407 = vmor %vm405, %vm406
    %v408 = vsel %vm407, %v400, %v404
    %v409 = vand.u32 2147483647, %v248
    %vm410 = vcmp.eq.f32.partialorder %v409, 8.507059e+37
    %v411 = vand.u32 %v248, 2147483648
    %v412 = vor.u32 1.1754944e-38, %v411
    %v413 = vsel %vm410, %v412, %v408
    %v414 = vmul.f32 1.0, %v413
    %v415 = vrcp.pop %v249
    %v416 = vmul.f32 %v249, %v415
    %v417 = vsub.f32 1.0, %v416
    %v418 = vmul.f32 %v415, %v417
    %v419 = vadd.f32 %v415, %v418
    %vm420 = vweird.f32 %v249
    %vm421 = vweird.f32 %v415
    %vm422 = vmor %vm420, %vm421
    %v423 = vsel %vm422, %v415, %v419
    %v424 = vand.u32 2147483647, %v249
    %vm425 = vcmp.eq.f32.partialorder %v424, 8.507059e+37
    %v426 = vand.u32 %v249, 2147483648
    %v427 = vor.u32 1.1754944e-38, %v426
    %v428 = vsel %vm425, %v427, %v423
    %v429 = vmul.f32 1.0, %v428
    %431 = vset.pattern.permute.xlu0 0
    %432 = vperm.xlu0 %431, %v99
    %v433 = vpop.permute.xlu0 %432
    %v435 = vmul.f32 %v86, %v433
    %v436 = vmul.f32 %v87, %v433
    %v437 = vmul.f32 %v88, %v433
    %v438 = vmul.f32 %v89, %v433
    %v439 = vmul.f32 %v90, %v433
    %v440 = vmul.f32 %v91, %v433
    %v441 = vmul.f32 %v92, %v433
    %v442 = vmul.f32 %v93, %v433
    %v443 = vmul.f32 %v94, %v433
    %v444 = vmul.f32 %v95, %v433
    %v445 = vmul.f32 %v96, %v433
    %v446 = vmul.f32 %v97, %v433
    %v447 = vrot.slane %v435, 4
    %v448 = vadd.f32 %v435, %v447
    %v449 = vrot.slane %v448, 2
    %v450 = vadd.f32 %v448, %v449
    %v451 = vrot.slane %v450, 1
    %v452 = vadd.f32 %v450, %v451
    %v453 = vrot.slane %v436, 4
    %v454 = vadd.f32 %v436, %v453
    %v455 = vrot.slane %v454, 2
    %v456 = vadd.f32 %v454, %v455
    %v457 = vrot.slane %v456, 1
    %v458 = vadd.f32 %v456, %v457
    %v459 = vrot.slane %v437, 4
    %v460 = vadd.f32 %v437, %v459
    %v461 = vrot.slane %v460, 2
    %v462 = vadd.f32 %v460, %v461
    %v463 = vrot.slane %v462, 1
    %v464 = vadd.f32 %v462, %v463
    %v465 = vrot.slane %v438, 4
    %v466 = vadd.f32 %v438, %v465
    %v467 = vrot.slane %v466, 2
    %v468 = vadd.f32 %v466, %v467
    %v469 = vrot.slane %v468, 1
    %v470 = vadd.f32 %v468, %v469
    %v471 = vrot.slane %v439, 4
    %v472 = vadd.f32 %v439, %v471
    %v473 = vrot.slane %v472, 2
    %v474 = vadd.f32 %v472, %v473
    %v475 = vrot.slane %v474, 1
    %v476 = vadd.f32 %v474, %v475
    %v477 = vrot.slane %v440, 4
    %v478 = vadd.f32 %v440, %v477
    %v479 = vrot.slane %v478, 2
    %v480 = vadd.f32 %v478, %v479
    %v481 = vrot.slane %v480, 1
    %v482 = vadd.f32 %v480, %v481
    %v483 = vrot.slane %v441, 4
    %v484 = vadd.f32 %v441, %v483
    %v485 = vrot.slane %v484, 2
    %v486 = vadd.f32 %v484, %v485
    %v487 = vrot.slane %v486, 1
    %v488 = vadd.f32 %v486, %v487
    %v489 = vrot.slane %v442, 4
    %v490 = vadd.f32 %v442, %v489
    %v491 = vrot.slane %v490, 2
    %v492 = vadd.f32 %v490, %v491
    %v493 = vrot.slane %v492, 1
    %v494 = vadd.f32 %v492, %v493
    %v495 = vrot.slane %v443, 4
    %v496 = vadd.f32 %v443, %v495
    %v497 = vrot.slane %v496, 2
    %v498 = vadd.f32 %v496, %v497
    %v499 = vrot.slane %v498, 1
    %v500 = vadd.f32 %v498, %v499
    %v501 = vrot.slane %v444, 4
    %v502 = vadd.f32 %v444, %v501
    %v503 = vrot.slane %v502, 2
    %v504 = vadd.f32 %v502, %v503
    %v505 = vrot.slane %v504, 1
    %v506 = vadd.f32 %v504, %v505
    %v507 = vrot.slane %v445, 4
    %v508 = vadd.f32 %v445, %v507
    %v509 = vrot.slane %v508, 2
    %v510 = vadd.f32 %v508, %v509
    %v511 = vrot.slane %v510, 1
    %v512 = vadd.f32 %v510, %v511
    %v513 = vrot.slane %v446, 4
    %v514 = vadd.f32 %v446, %v513
    %v515 = vrot.slane %v514, 2
    %v516 = vadd.f32 %v514, %v515
    %v517 = vrot.slane %v516, 1
    %v518 = vadd.f32 %v516, %v517
    %v519 = vstv %s73
    %v520 = vadd.f32 %v452, %v519
    %v521 = vadd.f32 %v458, %v519
    %v522 = vadd.f32 %v464, %v519
    %v523 = vadd.f32 %v470, %v519
    %v524 = vadd.f32 %v476, %v519
    %v525 = vadd.f32 %v482, %v519
    %v526 = vadd.f32 %v488, %v519
    %v527 = vadd.f32 %v494, %v519
    %v528 = vadd.f32 %v500, %v519
    %v529 = vadd.f32 %v506, %v519
    %v530 = vadd.f32 %v512, %v519
    %v531 = vadd.f32 %v518, %v519
    %v532 = vxor.u32 %v520, 2147483648
    %v533 = vxor.u32 %v521, 2147483648
    %v534 = vxor.u32 %v522, 2147483648
    %v535 = vxor.u32 %v523, 2147483648
    %v536 = vxor.u32 %v524, 2147483648
    %v537 = vxor.u32 %v525, 2147483648
    %v538 = vxor.u32 %v526, 2147483648
    %v539 = vxor.u32 %v527, 2147483648
    %v540 = vxor.u32 %v528, 2147483648
    %v541 = vxor.u32 %v529, 2147483648
    %v542 = vxor.u32 %v530, 2147483648
    %v543 = vxor.u32 %v531, 2147483648
    %v544 = vmul.f32 %v532, 1.442695
    %v545 = vpow.pop %v544
    %v546 = vmul.f32 %v533, 1.442695
    %v547 = vpow.pop %v546
    %v548 = vmul.f32 %v534, 1.442695
    %v549 = vpow.pop %v548
    %v550 = vmul.f32 %v535, 1.442695
    %v551 = vpow.pop %v550
    %v552 = vmul.f32 %v536, 1.442695
    %v553 = vpow.pop %v552
    %v554 = vmul.f32 %v537, 1.442695
    %v555 = vpow.pop %v554
    %v556 = vmul.f32 %v538, 1.442695
    %v557 = vpow.pop %v556
    %v558 = vmul.f32 %v539, 1.442695
    %v559 = vpow.pop %v558
    %v560 = vmul.f32 %v540, 1.442695
    %v561 = vpow.pop %v560
    %v562 = vmul.f32 %v541, 1.442695
    %v563 = vpow.pop %v562
    %v564 = vmul.f32 %v542, 1.442695
    %v565 = vpow.pop %v564
    %v566 = vmul.f32 %v543, 1.442695
    %v567 = vpow.pop %v566
    %v568 = vadd.f32 %v545, 1.0
    %v569 = vadd.f32 %v547, 1.0
    %v570 = vadd.f32 %v549, 1.0
    %v571 = vadd.f32 %v551, 1.0
    %v572 = vadd.f32 %v553, 1.0
    %v573 = vadd.f32 %v555, 1.0
    %v574 = vadd.f32 %v557, 1.0
    %v575 = vadd.f32 %v559, 1.0
    %v576 = vadd.f32 %v561, 1.0
    %v577 = vadd.f32 %v563, 1.0
    %v578 = vadd.f32 %v565, 1.0
    %v579 = vadd.f32 %v567, 1.0
    %v580 = vrcp.pop %v568
    %v581 = vmul.f32 %v568, %v580
    %v582 = vsub.f32 1.0, %v581
    %v583 = vmul.f32 %v580, %v582
    %v584 = vadd.f32 %v580, %v583
    %vm585 = vweird.f32 %v568
    %vm586 = vweird.f32 %v580
    %vm587 = vmor %vm585, %vm586
    %v588 = vsel %vm587, %v580, %v584
    %v589 = vand.u32 2147483647, %v568
    %vm590 = vcmp.eq.f32.partialorder %v589, 8.507059e+37
    %v591 = vand.u32 %v568, 2147483648
    %v592 = vor.u32 1.1754944e-38, %v591
    %v593 = vsel %vm590, %v592, %v588
    %v594 = vmul.f32 1.0, %v593
    %v595 = vrcp.pop %v569
    %v596 = vmul.f32 %v569, %v595
    %v597 = vsub.f32 1.0, %v596
    %v598 = vmul.f32 %v595, %v597
    %v599 = vadd.f32 %v595, %v598
    %vm600 = vweird.f32 %v569
    %vm601 = vweird.f32 %v595
    %vm602 = vmor %vm600, %vm601
    %v603 = vsel %vm602, %v595, %v599
    %v604 = vand.u32 2147483647, %v569
    %vm605 = vcmp.eq.f32.partialorder %v604, 8.507059e+37
    %v606 = vand.u32 %v569, 2147483648
    %v607 = vor.u32 1.1754944e-38, %v606
    %v608 = vsel %vm605, %v607, %v603
    %v609 = vmul.f32 1.0, %v608
    %v610 = vrcp.pop %v570
    %v611 = vmul.f32 %v570, %v610
    %v612 = vsub.f32 1.0, %v611
    %v613 = vmul.f32 %v610, %v612
    %v614 = vadd.f32 %v610, %v613
    %vm615 = vweird.f32 %v570
    %vm616 = vweird.f32 %v610
    %vm617 = vmor %vm615, %vm616
    %v618 = vsel %vm617, %v610, %v614
    %v619 = vand.u32 2147483647, %v570
    %vm620 = vcmp.eq.f32.partialorder %v619, 8.507059e+37
    %v621 = vand.u32 %v570, 2147483648
    %v622 = vor.u32 1.1754944e-38, %v621
    %v623 = vsel %vm620, %v622, %v618
    %v624 = vmul.f32 1.0, %v623
    %v625 = vrcp.pop %v571
    %v626 = vmul.f32 %v571, %v625
    %v627 = vsub.f32 1.0, %v626
    %v628 = vmul.f32 %v625, %v627
    %v629 = vadd.f32 %v625, %v628
    %vm630 = vweird.f32 %v571
    %vm631 = vweird.f32 %v625
    %vm632 = vmor %vm630, %vm631
    %v633 = vsel %vm632, %v625, %v629
    %v634 = vand.u32 2147483647, %v571
    %vm635 = vcmp.eq.f32.partialorder %v634, 8.507059e+37
    %v636 = vand.u32 %v571, 2147483648
    %v637 = vor.u32 1.1754944e-38, %v636
    %v638 = vsel %vm635, %v637, %v633
    %v639 = vmul.f32 1.0, %v638
    %v640 = vrcp.pop %v572
    %v641 = vmul.f32 %v572, %v640
    %v642 = vsub.f32 1.0, %v641
    %v643 = vmul.f32 %v640, %v642
    %v644 = vadd.f32 %v640, %v643
    %vm645 = vweird.f32 %v572
    %vm646 = vweird.f32 %v640
    %vm647 = vmor %vm645, %vm646
    %v648 = vsel %vm647, %v640, %v644
    %v649 = vand.u32 2147483647, %v572
    %vm650 = vcmp.eq.f32.partialorder %v649, 8.507059e+37
    %v651 = vand.u32 %v572, 2147483648
    %v652 = vor.u32 1.1754944e-38, %v651
    %v653 = vsel %vm650, %v652, %v648
    %v654 = vmul.f32 1.0, %v653
    %v655 = vrcp.pop %v573
    %v656 = vmul.f32 %v573, %v655
    %v657 = vsub.f32 1.0, %v656
    %v658 = vmul.f32 %v655, %v657
    %v659 = vadd.f32 %v655, %v658
    %vm660 = vweird.f32 %v573
    %vm661 = vweird.f32 %v655
    %vm662 = vmor %vm660, %vm661
    %v663 = vsel %vm662, %v655, %v659
    %v664 = vand.u32 2147483647, %v573
    %vm665 = vcmp.eq.f32.partialorder %v664, 8.507059e+37
    %v666 = vand.u32 %v573, 2147483648
    %v667 = vor.u32 1.1754944e-38, %v666
    %v668 = vsel %vm665, %v667, %v663
    %v669 = vmul.f32 1.0, %v668
    %v670 = vrcp.pop %v574
    %v671 = vmul.f32 %v574, %v670
    %v672 = vsub.f32 1.0, %v671
    %v673 = vmul.f32 %v670, %v672
    %v674 = vadd.f32 %v670, %v673
    %vm675 = vweird.f32 %v574
    %vm676 = vweird.f32 %v670
    %vm677 = vmor %vm675, %vm676
    %v678 = vsel %vm677, %v670, %v674
    %v679 = vand.u32 2147483647, %v574
    %vm680 = vcmp.eq.f32.partialorder %v679, 8.507059e+37
    %v681 = vand.u32 %v574, 2147483648
    %v682 = vor.u32 1.1754944e-38, %v681
    %v683 = vsel %vm680, %v682, %v678
    %v684 = vmul.f32 1.0, %v683
    %v685 = vrcp.pop %v575
    %v686 = vmul.f32 %v575, %v685
    %v687 = vsub.f32 1.0, %v686
    %v688 = vmul.f32 %v685, %v687
    %v689 = vadd.f32 %v685, %v688
    %vm690 = vweird.f32 %v575
    %vm691 = vweird.f32 %v685
    %vm692 = vmor %vm690, %vm691
    %v693 = vsel %vm692, %v685, %v689
    %v694 = vand.u32 2147483647, %v575
    %vm695 = vcmp.eq.f32.partialorder %v694, 8.507059e+37
    %v696 = vand.u32 %v575, 2147483648
    %v697 = vor.u32 1.1754944e-38, %v696
    %v698 = vsel %vm695, %v697, %v693
    %v699 = vmul.f32 1.0, %v698
    %v700 = vrcp.pop %v576
    %v701 = vmul.f32 %v576, %v700
    %v702 = vsub.f32 1.0, %v701
    %v703 = vmul.f32 %v700, %v702
    %v704 = vadd.f32 %v700, %v703
    %vm705 = vweird.f32 %v576
    %vm706 = vweird.f32 %v700
    %vm707 = vmor %vm705, %vm706
    %v708 = vsel %vm707, %v700, %v704
    %v709 = vand.u32 2147483647, %v576
    %vm710 = vcmp.eq.f32.partialorder %v709, 8.507059e+37
    %v711 = vand.u32 %v576, 2147483648
    %v712 = vor.u32 1.1754944e-38, %v711
    %v713 = vsel %vm710, %v712, %v708
    %v714 = vmul.f32 1.0, %v713
    %v715 = vrcp.pop %v577
    %v716 = vmul.f32 %v577, %v715
    %v717 = vsub.f32 1.0, %v716
    %v718 = vmul.f32 %v715, %v717
    %v719 = vadd.f32 %v715, %v718
    %vm720 = vweird.f32 %v577
    %vm721 = vweird.f32 %v715
    %vm722 = vmor %vm720, %vm721
    %v723 = vsel %vm722, %v715, %v719
    %v724 = vand.u32 2147483647, %v577
    %vm725 = vcmp.eq.f32.partialorder %v724, 8.507059e+37
    %v726 = vand.u32 %v577, 2147483648
    %v727 = vor.u32 1.1754944e-38, %v726
    %v728 = vsel %vm725, %v727, %v723
    %v729 = vmul.f32 1.0, %v728
    %v730 = vrcp.pop %v578
    %v731 = vmul.f32 %v578, %v730
    %v732 = vsub.f32 1.0, %v731
    %v733 = vmul.f32 %v730, %v732
    %v734 = vadd.f32 %v730, %v733
    %vm735 = vweird.f32 %v578
    %vm736 = vweird.f32 %v730
    %vm737 = vmor %vm735, %vm736
    %v738 = vsel %vm737, %v730, %v734
    %v739 = vand.u32 2147483647, %v578
    %vm740 = vcmp.eq.f32.partialorder %v739, 8.507059e+37
    %v741 = vand.u32 %v578, 2147483648
    %v742 = vor.u32 1.1754944e-38, %v741
    %v743 = vsel %vm740, %v742, %v738
    %v744 = vmul.f32 1.0, %v743
    %v745 = vrcp.pop %v579
    %v746 = vmul.f32 %v579, %v745
    %v747 = vsub.f32 1.0, %v746
    %v748 = vmul.f32 %v745, %v747
    %v749 = vadd.f32 %v745, %v748
    %vm750 = vweird.f32 %v579
    %vm751 = vweird.f32 %v745
    %vm752 = vmor %vm750, %vm751
    %v753 = vsel %vm752, %v745, %v749
    %v754 = vand.u32 2147483647, %v579
    %vm755 = vcmp.eq.f32.partialorder %v754, 8.507059e+37
    %v756 = vand.u32 %v579, 2147483648
    %v757 = vor.u32 1.1754944e-38, %v756
    %v758 = vsel %vm755, %v757, %v753
    %v759 = vmul.f32 1.0, %v758
    %v760 = vadd.f32 %v594, 1.0
    %v761 = vadd.f32 %v609, 1.0
    %v762 = vadd.f32 %v624, 1.0
    %v763 = vadd.f32 %v639, 1.0
    %v764 = vadd.f32 %v654, 1.0
    %v765 = vadd.f32 %v669, 1.0
    %v766 = vadd.f32 %v684, 1.0
    %v767 = vadd.f32 %v699, 1.0
    %v768 = vadd.f32 %v714, 1.0
    %v769 = vadd.f32 %v729, 1.0
    %v770 = vadd.f32 %v744, 1.0
    %v771 = vadd.f32 %v759, 1.0
    %v772 = vmul.f32 %v74, %v760
    %v773 = vmul.f32 %v75, %v761
    %v774 = vmul.f32 %v76, %v762
    %v775 = vmul.f32 %v77, %v763
    %v776 = vmul.f32 %v78, %v764
    %v777 = vmul.f32 %v79, %v765
    %v778 = vmul.f32 %v80, %v766
    %v779 = vmul.f32 %v81, %v767
    %v780 = vmul.f32 %v82, %v768
    %v781 = vmul.f32 %v83, %v769
    %v782 = vmul.f32 %v84, %v770
    %v783 = vmul.f32 %v85, %v771
    %v784 = vadd.f32 %v264, 1.0
    %v785 = vadd.f32 %v279, 1.0
    %v786 = vadd.f32 %v294, 1.0
    %v787 = vadd.f32 %v309, 1.0
    %v788 = vadd.f32 %v324, 1.0
    %v789 = vadd.f32 %v339, 1.0
    %v790 = vadd.f32 %v354, 1.0
    %v791 = vadd.f32 %v369, 1.0
    %v792 = vadd.f32 %v384, 1.0
    %v793 = vadd.f32 %v399, 1.0
    %v794 = vadd.f32 %v414, 1.0
    %v795 = vadd.f32 %v429, 1.0
    %v796 = vmul.f32 %v86, %v784
    %v797 = vmul.f32 %v87, %v785
    %v798 = vmul.f32 %v88, %v786
    %v799 = vmul.f32 %v89, %v787
    %v800 = vmul.f32 %v90, %v788
    %v801 = vmul.f32 %v91, %v789
    %v802 = vmul.f32 %v92, %v790
    %v803 = vmul.f32 %v93, %v791
    %v804 = vmul.f32 %v94, %v792
    %v805 = vmul.f32 %v95, %v793
    %v806 = vmul.f32 %v96, %v794
    %v807 = vmul.f32 %v97, %v795
    %v808 = vadd.f32 %v772, %v796
    %v809 = vadd.f32 %v773, %v797
    %v810 = vadd.f32 %v774, %v798
    %v811 = vadd.f32 %v775, %v799
    %v812 = vadd.f32 %v776, %v800
    %v813 = vadd.f32 %v777, %v801
    %v814 = vadd.f32 %v778, %v802
    %v815 = vadd.f32 %v779, %v803
    %v816 = vadd.f32 %v780, %v804
    %v817 = vadd.f32 %v781, %v805
    %v818 = vadd.f32 %v782, %v806
    %v819 = vadd.f32 %v783, %v807
    %v820 = vadd.f32 %v808, %v809
    %v821 = vadd.f32 %v820, %v810
    %822 = vadd.xlane.f32.xlu0 %v821
    %v823 = vpop.xlane.xlu0 %822
    %v824 = vadd.f32 %v811, %v812
    %v825 = vadd.f32 %v824, %v813
    %826 = vadd.xlane.f32.xlu0 %v825
    %v827 = vpop.xlane.xlu0 %826
    %v828 = vadd.f32 %v814, %v815
    %v829 = vadd.f32 %v828, %v816
    %830 = vadd.xlane.f32.xlu0 %v829
    %v831 = vpop.xlane.xlu0 %830
    %v832 = vadd.f32 %v817, %v818
    %v833 = vadd.f32 %v832, %v819
    %834 = vadd.xlane.f32.xlu0 %v833
    %v835 = vpop.xlane.xlu0 %834
    %v836 = vrcp.pop 384.0
    %v837 = vmul.f32 384.0, %v836
    %v838 = vsub.f32 1.0, %v837
    %v839 = vmul.f32 %v836, %v838
    %v840 = vadd.f32 %v836, %v839
    %vm841 = vweird.f32 %v836
    %v842 = vsel %vm841, %v836, %v840
    %v843 = vmul.f32 %v823, %v842
    %v844 = vmul.f32 %v827, %v842
    %v845 = vmul.f32 %v831, %v842
    %v846 = vmul.f32 %v835, %v842
    %v847 = vld [vmem:[%s5] sm:$0xff]
    %v852 = vlaneseq
    %v853 = vand.u32 %v852, 127
    %v854 = vperm.slane %v843, %v853
    %v855 = vperm.slane %v844, %v853
    %v856 = vperm.slane %v845, %v853
    %v857 = vperm.slane %v846, %v853
    %vm858 = vcmask 1041409
    %v859 = vsel %vm858, %v855, %v854
    %vm860 = vcmask 1042434
    %v861 = vsel %vm860, %v856, %v859
    %vm862 = vcmask 1043459
    %v863 = vsel %vm862, %v857, %v861
    %vm864 = vcmask 64512
    %v865 = vsel %vm864, %v863, 0
    %867 = vmatpush.msra.mxu0 0.0
    %868 = vmatpush.msra.mxu0 0.0
    %869 = vmatpush.msra.mxu0 0.0
    %870 = vmatpush.msra.mxu0 0.0
    %871 = vmatpush.msra.mxu0 0.0
    %872 = vmatpush.msra.mxu0 0.0
    %873 = vmatpush.msra.mxu0 0.0
    %874 = vmatpush.msra.mxu0 0.0
    %875 = vmatpush.msra.mxu0 0.0
    %876 = vmatpush.msra.mxu0 0.0
    %877 = vmatpush.msra.mxu0 0.0
    %878 = vmatpush.msra.mxu0 0.0
    %879 = vmatpush.msra.mxu0 0.0
    %880 = vmatpush.msra.mxu0 0.0
    %881 = vmatpush.msra.mxu0 0.0
    %882 = vmatpush.msra.mxu0 %v847
    %883 = vmatmul.f32.gmra.mxu0 %v865
    %v884 = vpop.f32.mrf.mxu0
    %v885 = vadd.f32 0.0, %v884
    %886 = vdwg.mxu0
    %v887 = vmax.f32 %v885, 0.0
    %v888 = vld [vmem:[%s6] sm:$0x3]
    %vm889 = vcmask 15360
    %v891 = vsel %vm889, %v887, 0
    %vm893 = vcmask 1041408
    %v895 = vsel %vm893, %v888, 0
    %897 = vmatpush.msra.mxu0 0.0
    %898 = vmatpush.msra.mxu0 0.0
    %899 = vmatpush.msra.mxu0 0.0
    %900 = vmatpush.msra.mxu0 0.0
    %901 = vmatpush.msra.mxu0 0.0
    %902 = vmatpush.msra.mxu0 0.0
    %903 = vmatpush.msra.mxu0 0.0
    %904 = vmatpush.msra.mxu0 0.0
    %905 = vmatpush.msra.mxu0 0.0
    %906 = vmatpush.msra.mxu0 0.0
    %907 = vmatpush.msra.mxu0 0.0
    %908 = vmatpush.msra.mxu0 0.0
    %909 = vmatpush.msra.mxu0 0.0
    %910 = vmatpush.msra.mxu0 0.0
    %911 = vmatpush.msra.mxu0 0.0
    %912 = vmatpush.msra.mxu0 %v895
    %913 = vmatmul.f32.gmra.mxu0 %v891
    %v914 = vpop.f32.mrf.mxu0
    %v915 = vadd.f32 0.0, %v914
    %916 = vdwg.mxu0
    %v917 = vxor.u32 %v915, 2147483648
    %v918 = vmul.f32 %v917, 1.442695
    %v919 = vpow.pop %v918
    %v920 = vadd.f32 %v919, 1.0
    %v921 = vrcp.pop %v920
    %v922 = vmul.f32 %v920, %v921
    %v923 = vsub.f32 1.0, %v922
    %v924 = vmul.f32 %v921, %v923
    %v925 = vadd.f32 %v921, %v924
    %vm926 = vweird.f32 %v920
    %vm927 = vweird.f32 %v921
    %vm928 = vmor %vm926, %vm927
    %v929 = vsel %vm928, %v921, %v925
    %v930 = vand.u32 2147483647, %v920
    %vm931 = vcmp.eq.f32.partialorder %v930, 8.507059e+37
    %v932 = vand.u32 %v920, 2147483648
    %v933 = vor.u32 1.1754944e-38, %v932
    %v934 = vsel %vm931, %v933, %v929
    %v935 = vmul.f32 1.0, %v934
    %v936 = vperm.slane %v935, 0
    %v937 = vlaneseq
    %v938 = vshrl.u32 %v937, 7
    %940 = vset.pattern.permute.xlu0 %v938
    %941 = vperm.xlu0 %940, %v936
    %v942 = vpop.permute.xlu0 %941
    %v943 = vperm.slane %v935, 1
    %v944 = vlaneseq
    %v945 = vshrl.u32 %v944, 7
    %947 = vset.pattern.permute.xlu0 %v945
    %948 = vperm.xlu0 %947, %v943
    %v949 = vpop.permute.xlu0 %948
    %v950 = vperm.slane %v935, 2
    %v951 = vlaneseq
    %v952 = vshrl.u32 %v951, 7
    %954 = vset.pattern.permute.xlu0 %v952
    %955 = vperm.xlu0 %954, %v950
    %v956 = vpop.permute.xlu0 %955
    %v957 = vperm.slane %v935, 3
    %v958 = vlaneseq
    %v959 = vshrl.u32 %v958, 7
    %961 = vset.pattern.permute.xlu0 %v959
    %962 = vperm.xlu0 %961, %v957
    %v963 = vpop.permute.xlu0 %962
    %v964 = vmul.f32 %v808, %v942
    %v965 = vmul.f32 %v809, %v942
    %v966 = vmul.f32 %v810, %v942
    %v967 = vmul.f32 %v811, %v949
    %v968 = vmul.f32 %v812, %v949
    %v969 = vmul.f32 %v813, %v949
    %v970 = vmul.f32 %v814, %v956
    %v971 = vmul.f32 %v815, %v956
    %v972 = vmul.f32 %v816, %v956
    %v973 = vmul.f32 %v817, %v963
    %v974 = vmul.f32 %v818, %v963
    %v975 = vmul.f32 %v819, %v963
    %976 = vst [vmem:[#allocation9] sm:$0xff] %v964
    %977 = vst [vmem:[#allocation9 + $0x8] sm:$0xff] %v965
    %978 = vst [vmem:[#allocation9 + $0x10] sm:$0xff] %v966
    %979 = vst [vmem:[#allocation9 + $0x18] sm:$0xff] %v967
    %980 = vst [vmem:[#allocation9 + $0x20] sm:$0xff] %v968
    %981 = vst [vmem:[#allocation9 + $0x28] sm:$0xff] %v969
    %982 = vst [vmem:[#allocation9 + $0x30] sm:$0xff] %v970
    %983 = vst [vmem:[#allocation9 + $0x38] sm:$0xff] %v971
    %984 = vst [vmem:[#allocation9 + $0x40] sm:$0xff] %v972
    %985 = vst [vmem:[#allocation9 + $0x48] sm:$0xff] %v973
    %986 = vst [vmem:[#allocation9 + $0x50] sm:$0xff] %v974
    %987 = vst [vmem:[#allocation9 + $0x58] sm:$0xff] %v975
    // Predicated region
    $region42: #{tpu_custom_call.1} parent=1 // pred_check
      _
    $region43: #{tpu_custom_call.1} parent=1 // pred_check_branch
      %989 = sbr.rel (0) target = $region45
    $region44: #{tpu_custom_call.1} parent=1 // pred_region
      %991 = vsyncadd [#allocation4], 0
      %s992 = sshll.u32 [#allocation9], 4
      %s993 = int_to_ptr.vmem [resolvable:$true] %s992
      %s994 = sshll.u32 %s7, 4
      %s995 = int_to_ptr.hbm [resolvable:$true] %s994
      %1000 = dma.vmem_to_hbm [thread:$0]  %s993, 1536, %s995, [#allocation4], 384, 384, 24
    $region45: #{tpu_custom_call.1} parent=1 // pred_fallthru
      _
    // Predicated region
    $region46: #{tpu_custom_call.1} parent=1 // pred_check
      _
    $region47: #{tpu_custom_call.1} parent=1 // pred_check_branch
      %1002 = sbr.rel (0) target = $region49
    $region48: #{tpu_custom_call.1} parent=1 // pred_region
      %1004 = dma.done [#allocation4], 1536
    $region49: #{tpu_custom_call.1} parent=1 // pred_fallthru
      _
    %1005 = vsyncpa [#allocation3], 1
    %1006 = vsyncpa [#allocation8], 1
    %1007 = vsyncpa [#allocation4], 1
    %1008 = vsyncpa [#allocation5], 1

</llo_original>
